<compile_context>
chip_gen: v7x
topology: tpu7x:2x2x1
jax: 0.10.0
libtpu: 0.0.40
codegen_flags: <defaults>
</compile_context>

<pallas_src>
import math

import jax
import jax.numpy as jnp
from jax import lax
from jax.experimental import pallas as pl
from jax.experimental.pallas import tpu as pltpu


_UNROLL = 8  # static unroll factor for the per-row emit loop


def _emit_outer_rows(src_ref, a, d_k, dst_ref, d_m):
    """dst[i*d_k + r, :] = src[i, :] * a[r, :]  for i in [0, d_m).

    src_ref : VMEM ref (d_m, B)      -- accumulated fused vector (batch on lanes)
    a       : value    (d_k, B)      -- augmented next modality
    dst_ref : VMEM ref (d_m*d_k, B)  -- destination (scratch or output block)
    Every store is a (d_k, B)-shaped, full-lane slab (lane-dense).
    """
    out_dtype = dst_ref.dtype

    def emit(i):
        row = src_ref[pl.ds(i, 1), :]                       # (1, B) sublane row
        dst_ref[pl.ds(i * d_k, d_k), :] = (row * a).astype(out_dtype)

    if d_m <= 4 * _UNROLL:
        # Small static trip count: fully unroll at trace time (static slices).
        for i in range(d_m):
            emit(i)
    else:
        n_chunks = d_m // _UNROLL

        def body(c, carry):
            base = pl.multiple_of(c * _UNROLL, _UNROLL)
            for u in range(_UNROLL):                        # static partial unroll
                emit(base + u)
            return carry

        lax.fori_loop(0, n_chunks, body, 0)
        for i in range(n_chunks * _UNROLL, d_m):            # static remainder
            emit(i)


def _make_fusion_kernel(feat_dims):
    """Build a kernel fusing len(feat_dims) modalities in one pass."""
    n = len(feat_dims)
    aug_dims = tuple(d + 1 for d in feat_dims)

    def kernel(*refs):
        in_refs = refs[:n]                 # (d_k, B_TILE) raw modalities
        out_ref = refs[n]                  # (D_out, B_TILE)
        aug_refs = refs[n + 1:2 * n + 1]   # VMEM scratch, (d_k + 1, B_TILE) f32
        inter_refs = refs[2 * n + 1:]      # VMEM scratch for intermediate fusions

        b = out_ref.shape[-1]              # batch tile, lane axis

        # Augment each modality with a leading row of ones: a_k = [1 ; x_k].
        for k in range(n):
            aug_refs[k][0:1, :] = jnp.ones((1, b), jnp.float32)
            aug_refs[k][1:, :] = in_refs[k][...].astype(jnp.float32)

        # Left-to-right chain of batched outer products, batch on lanes.
        src = aug_refs[0]
        d_m = aug_dims[0]
        for k in range(1, n):
            a = aug_refs[k][...]                            # (aug_dims[k], B)
            dst = out_ref if k == n - 1 else inter_refs[k - 1]
            _emit_outer_rows(src, a, aug_dims[k], dst, d_m)
            src = dst
            d_m *= aug_dims[k]

    return kernel


def _round_up(x, m):
    return ((x + m - 1) // m) * m


def _choose_batch_tile(batch, d_out, max_batch_tile=None):
    """Pick a lane-aligned batch tile sized for double-buffered VMEM."""
    if batch < 128:
        # Tiny batch: full-extent lane block (allowed), single grid step.
        return batch, batch
    target_bytes = 16 * 1024 * 1024            # budget for the 2x-buffered f32 out block
    per_lane = d_out * 4 * 2
    bt = target_bytes // max(per_lane, 1)
    bt = max(128, min(1024, (bt // 128) * 128))
    bt = min(bt, _round_up(batch, 128))
    if max_batch_tile is not None:
        bt = max(128, min(bt, (max_batch_tile // 128) * 128))
    return bt, _round_up(batch, bt)
    # TODO(synk): for very large fused dims (D_out * 128 lanes * f32 * 2 buffers
    # exceeding VMEM) also tile the output-feature axis with a second grid dim.


def tensor_fusion(modalities, *, max_batch_tile=None):
    """JAX/Pallas equivalent of TensorFusion.forward (single fused kernel)."""
    if len(modalities) == 1:
        return modalities[0]

    mod0 = modalities[0]
    batch_shape = mod0.shape[:-1]
    for m in modalities[1:]:
        assert m.shape[:-1] == batch_shape, "modalities must share batch dims"

    out_dtype = jnp.result_type(*[m.dtype for m in modalities])
    feat_dims = [int(m.shape[-1]) for m in modalities]
    aug_dims = [d + 1 for d in feat_dims]
    d_out = math.prod(aug_dims)
    n = len(modalities)
    batch = int(math.prod(batch_shape)) if batch_shape else 1

    # Transposed (feature, batch) inputs: batch goes on the lane axis.
    xs = [m.reshape(batch, d).T for m, d in zip(modalities, feat_dims)]

    b_tile, b_pad = _choose_batch_tile(batch, d_out, max_batch_tile)
    if b_pad != batch:
        xs = [jnp.pad(x, ((0, 0), (0, b_pad - batch))) for x in xs]

    # Intermediate fused sizes (after fusing the first 2, 3, ..., n-1 modalities).
    inter_sizes = []
    acc = aug_dims[0]
    for k in range(1, n - 1):
        acc *= aug_dims[k]
        inter_sizes.append(acc)

    scratch_shapes = (
        [pltpu.VMEM((ad, b_tile), jnp.float32) for ad in aug_dims]
        + [pltpu.VMEM((s, b_tile), jnp.float32) for s in inter_sizes]
    )

    out_t = pl.pallas_call(
        _make_fusion_kernel(tuple(feat_dims)),
        out_shape=jax.ShapeDtypeStruct((d_out, b_pad), out_dtype),
        grid=(b_pad // b_tile,),
        in_specs=[pl.BlockSpec((d, b_tile), lambda b: (0, b)) for d in feat_dims],
        out_specs=pl.BlockSpec((d_out, b_tile), lambda b: (0, b)),
        scratch_shapes=scratch_shapes,
        compiler_params=pltpu.CompilerParams(
            dimension_semantics=("parallel",),
            vmem_limit_bytes=48 * 1024 * 1024,
        ),
    )(*xs)

    # Back to the module's (batch-major) layout; inputs/outputs untouched otherwise.
    out = out_t[:, :batch].T
    return out.reshape(batch_shape + (d_out,))


def tensor_fusion_ref(modalities):
    """Pure-JAX reference mirroring the PyTorch code."""
    if len(modalities) == 1:
        return modalities[0]
    mod0 = modalities[0]
    batch_shape = mod0.shape[:-1]
    m = jnp.concatenate(
        [jnp.ones(batch_shape + (1,), mod0.dtype), mod0], axis=-1)
    for mod in modalities[1:]:
        aug = jnp.concatenate(
            [jnp.ones(batch_shape + (1,), mod.dtype), mod], axis=-1)
        fused = jnp.einsum('...i,...j->...ij', m, aug)
        m = fused.reshape(batch_shape + (-1,))
    return m


if __name__ == "__main__":
    key = jax.random.PRNGKey(0)
    k0, k1, k2, k3, k4, k5 = jax.random.split(key, 6)

    # Test 1: small shapes, tiny batch (single full-extent lane block).
    batch = 2
    x0 = jax.random.normal(k0, (batch, 16), dtype=jnp.float32)
    x1 = jax.random.normal(k1, (batch, 8), dtype=jnp.float32)
    x2 = jax.random.normal(k2, (batch, 4), dtype=jnp.float32)
    mods = [x0, x1, x2]

    out = jax.block_until_ready(tensor_fusion(mods))
    ref = tensor_fusion_ref(mods)
    assert out.shape == (batch, (16 + 1) * (8 + 1) * (4 + 1)), out.shape
    assert jnp.allclose(out, ref, atol=1e-5, rtol=1e-5), "mismatch vs reference (test 1)"

    # Test 2: multi-dim batch >= 128 -> padded, lane-aligned batch tiles and a
    # multi-step "parallel" grid (exercises the pipelined production path).
    y0 = jax.random.normal(k3, (3, 100, 12), dtype=jnp.float32)
    y1 = jax.random.normal(k4, (3, 100, 7), dtype=jnp.float32)
    y2 = jax.random.normal(k5, (3, 100, 5), dtype=jnp.float32)
    mods2 = [y0, y1, y2]

    out2 = jax.block_until_ready(tensor_fusion(mods2, max_batch_tile=128))
    ref2 = tensor_fusion_ref(mods2)
    assert out2.shape == (3, 100, 13 * 8 * 6), out2.shape
    assert jnp.allclose(out2, ref2, atol=1e-5, rtol=1e-5), "mismatch vs reference (test 2)"

    # Single-modality passthrough.
    single = tensor_fusion([x0])
    assert jnp.array_equal(single, x0)

    print("KERNEL_OK")
</pallas_src>

<mosaic_0001>
module attributes {stable_mosaic.version = 11 : i64} {
  func.func @kernel(%arg0: i32, %arg1: memref<16x2xf32, #tpu.memory_space<vmem>>, %arg2: memref<8x2xf32, #tpu.memory_space<vmem>>, %arg3: memref<4x2xf32, #tpu.memory_space<vmem>>, %arg4: memref<765x2xf32, #tpu.memory_space<vmem>>, %arg5: memref<17x2xf32, #tpu.memory_space<vmem>>, %arg6: memref<9x2xf32, #tpu.memory_space<vmem>>, %arg7: memref<5x2xf32, #tpu.memory_space<vmem>>, %arg8: memref<153x2xf32, #tpu.memory_space<vmem>>) attributes {dimension_semantics = [#tpu.dimension_semantics<parallel>], iteration_bounds = array<i64: 1>, scalar_prefetch = 0 : i64, scratch_operands = 4 : i64, tpu.core_type = #tpu.core_type<tc>, window_params = [{transform_indices = @transform_0, window_bounds = array<i64: 16, 2>}, {transform_indices = @transform_1, window_bounds = array<i64: 8, 2>}, {transform_indices = @transform_2, window_bounds = array<i64: 4, 2>}, {transform_indices = @transform_3, window_bounds = array<i64: 765, 2>}]} {
    %cst = arith.constant 1.000000e+00 : f32
    %0 = vector.broadcast %cst : f32 to vector<1x2xf32>
    %c0 = arith.constant 0 : index
    %c0_0 = arith.constant 0 : index
    %1 = vector.load %arg5[%c0, %c0_0] : memref<17x2xf32, #tpu.memory_space<vmem>>, vector<1x2xf32>
    tpu.vector_store %arg5[%c0, %c0_0], %0 {strides = array<i32>} : memref<17x2xf32, #tpu.memory_space<vmem>>, vector<1x2xf32>,
    %c0_1 = arith.constant 0 : index
    %c0_2 = arith.constant 0 : index
    %2 = vector.load %arg1[%c0_1, %c0_2] : memref<16x2xf32, #tpu.memory_space<vmem>>, vector<16x2xf32>
    %c1 = arith.constant 1 : index
    %c0_3 = arith.constant 0 : index
    %3 = vector.load %arg5[%c1, %c0_3] : memref<17x2xf32, #tpu.memory_space<vmem>>, vector<16x2xf32>
    tpu.vector_store %arg5[%c1, %c0_3], %2 {strides = array<i32>} : memref<17x2xf32, #tpu.memory_space<vmem>>, vector<16x2xf32>,
    %cst_4 = arith.constant 1.000000e+00 : f32
    %4 = vector.broadcast %cst_4 : f32 to vector<1x2xf32>
    %c0_5 = arith.constant 0 : index
    %c0_6 = arith.constant 0 : index
    %5 = vector.load %arg6[%c0_5, %c0_6] : memref<9x2xf32, #tpu.memory_space<vmem>>, vector<1x2xf32>
    tpu.vector_store %arg6[%c0_5, %c0_6], %4 {strides = array<i32>} : memref<9x2xf32, #tpu.memory_space<vmem>>, vector<1x2xf32>,
    %c0_7 = arith.constant 0 : index
    %c0_8 = arith.constant 0 : index
    %6 = vector.load %arg2[%c0_7, %c0_8] : memref<8x2xf32, #tpu.memory_space<vmem>>, vector<8x2xf32>
    %c1_9 = arith.constant 1 : index
    %c0_10 = arith.constant 0 : index
    %7 = vector.load %arg6[%c1_9, %c0_10] : memref<9x2xf32, #tpu.memory_space<vmem>>, vector<8x2xf32>
    tpu.vector_store %arg6[%c1_9, %c0_10], %6 {strides = array<i32>} : memref<9x2xf32, #tpu.memory_space<vmem>>, vector<8x2xf32>,
    %cst_11 = arith.constant 1.000000e+00 : f32
    %8 = vector.broadcast %cst_11 : f32 to vector<1x2xf32>
    %c0_12 = arith.constant 0 : index
    %c0_13 = arith.constant 0 : index
    %9 = vector.load %arg7[%c0_12, %c0_13] : memref<5x2xf32, #tpu.memory_space<vmem>>, vector<1x2xf32>
    tpu.vector_store %arg7[%c0_12, %c0_13], %8 {strides = array<i32>} : memref<5x2xf32, #tpu.memory_space<vmem>>, vector<1x2xf32>,
    %c0_14 = arith.constant 0 : index
    %c0_15 = arith.constant 0 : index
    %10 = vector.load %arg3[%c0_14, %c0_15] : memref<4x2xf32, #tpu.memory_space<vmem>>, vector<4x2xf32>
    %c1_16 = arith.constant 1 : index
    %c0_17 = arith.constant 0 : index
    %11 = vector.load %arg7[%c1_16, %c0_17] : memref<5x2xf32, #tpu.memory_space<vmem>>, vector<4x2xf32>
    tpu.vector_store %arg7[%c1_16, %c0_17], %10 {strides = array<i32>} : memref<5x2xf32, #tpu.memory_space<vmem>>, vector<4x2xf32>,
    %c0_18 = arith.constant 0 : index
    %c0_19 = arith.constant 0 : index
    %12 = vector.load %arg6[%c0_18, %c0_19] : memref<9x2xf32, #tpu.memory_space<vmem>>, vector<9x2xf32>
    %c0_20 = arith.constant 0 : index
    %c0_21 = arith.constant 0 : index
    %13 = vector.load %arg5[%c0_20, %c0_21] : memref<17x2xf32, #tpu.memory_space<vmem>>, vector<1x2xf32>
    %14 = vector.broadcast %13 : vector<1x2xf32> to vector<9x2xf32>
    %15 = arith.mulf %14, %12 : vector<9x2xf32>
    %c0_22 = arith.constant 0 : index
    %c0_23 = arith.constant 0 : index
    %16 = vector.load %arg8[%c0_22, %c0_23] : memref<153x2xf32, #tpu.memory_space<vmem>>, vector<9x2xf32>
    tpu.vector_store %arg8[%c0_22, %c0_23], %15 {strides = array<i32>} : memref<153x2xf32, #tpu.memory_space<vmem>>, vector<9x2xf32>,
    %c1_24 = arith.constant 1 : index
    %c0_25 = arith.constant 0 : index
    %17 = vector.load %arg5[%c1_24, %c0_25] : memref<17x2xf32, #tpu.memory_space<vmem>>, vector<1x2xf32>
    %18 = vector.broadcast %17 : vector<1x2xf32> to vector<9x2xf32>
    %19 = arith.mulf %18, %12 : vector<9x2xf32>
    %c9 = arith.constant 9 : index
    %c0_26 = arith.constant 0 : index
    %20 = vector.load %arg8[%c9, %c0_26] : memref<153x2xf32, #tpu.memory_space<vmem>>, vector<9x2xf32>
    tpu.vector_store %arg8[%c9, %c0_26], %19 {strides = array<i32>} : memref<153x2xf32, #tpu.memory_space<vmem>>, vector<9x2xf32>,
    %c2 = arith.constant 2 : index
    %c0_27 = arith.constant 0 : index
    %21 = vector.load %arg5[%c2, %c0_27] : memref<17x2xf32, #tpu.memory_space<vmem>>, vector<1x2xf32>
    %22 = vector.broadcast %21 : vector<1x2xf32> to vector<9x2xf32>
    %23 = arith.mulf %22, %12 : vector<9x2xf32>
    %c18 = arith.constant 18 : index
    %c0_28 = arith.constant 0 : index
    %24 = vector.load %arg8[%c18, %c0_28] : memref<153x2xf32, #tpu.memory_space<vmem>>, vector<9x2xf32>
    tpu.vector_store %arg8[%c18, %c0_28], %23 {strides = array<i32>} : memref<153x2xf32, #tpu.memory_space<vmem>>, vector<9x2xf32>,
    %c3 = arith.constant 3 : index
    %c0_29 = arith.constant 0 : index
    %25 = vector.load %arg5[%c3, %c0_29] : memref<17x2xf32, #tpu.memory_space<vmem>>, vector<1x2xf32>
    %26 = vector.broadcast %25 : vector<1x2xf32> to vector<9x2xf32>
    %27 = arith.mulf %26, %12 : vector<9x2xf32>
    %c27 = arith.constant 27 : index
    %c0_30 = arith.constant 0 : index
    %28 = vector.load %arg8[%c27, %c0_30] : memref<153x2xf32, #tpu.memory_space<vmem>>, vector<9x2xf32>
    tpu.vector_store %arg8[%c27, %c0_30], %27 {strides = array<i32>} : memref<153x2xf32, #tpu.memory_space<vmem>>, vector<9x2xf32>,
    %c4 = arith.constant 4 : index
    %c0_31 = arith.constant 0 : index
    %29 = vector.load %arg5[%c4, %c0_31] : memref<17x2xf32, #tpu.memory_space<vmem>>, vector<1x2xf32>
    %30 = vector.broadcast %29 : vector<1x2xf32> to vector<9x2xf32>
    %31 = arith.mulf %30, %12 : vector<9x2xf32>
    %c36 = arith.constant 36 : index
    %c0_32 = arith.constant 0 : index
    %32 = vector.load %arg8[%c36, %c0_32] : memref<153x2xf32, #tpu.memory_space<vmem>>, vector<9x2xf32>
    tpu.vector_store %arg8[%c36, %c0_32], %31 {strides = array<i32>} : memref<153x2xf32, #tpu.memory_space<vmem>>, vector<9x2xf32>,
    %c5 = arith.constant 5 : index
    %c0_33 = arith.constant 0 : index
    %33 = vector.load %arg5[%c5, %c0_33] : memref<17x2xf32, #tpu.memory_space<vmem>>, vector<1x2xf32>
    %34 = vector.broadcast %33 : vector<1x2xf32> to vector<9x2xf32>
    %35 = arith.mulf %34, %12 : vector<9x2xf32>
    %c45 = arith.constant 45 : index
    %c0_34 = arith.constant 0 : index
    %36 = vector.load %arg8[%c45, %c0_34] : memref<153x2xf32, #tpu.memory_space<vmem>>, vector<9x2xf32>
    tpu.vector_store %arg8[%c45, %c0_34], %35 {strides = array<i32>} : memref<153x2xf32, #tpu.memory_space<vmem>>, vector<9x2xf32>,
    %c6 = arith.constant 6 : index
    %c0_35 = arith.constant 0 : index
    %37 = vector.load %arg5[%c6, %c0_35] : memref<17x2xf32, #tpu.memory_space<vmem>>, vector<1x2xf32>
    %38 = vector.broadcast %37 : vector<1x2xf32> to vector<9x2xf32>
    %39 = arith.mulf %38, %12 : vector<9x2xf32>
    %c54 = arith.constant 54 : index
    %c0_36 = arith.constant 0 : index
    %40 = vector.load %arg8[%c54, %c0_36] : memref<153x2xf32, #tpu.memory_space<vmem>>, vector<9x2xf32>
    tpu.vector_store %arg8[%c54, %c0_36], %39 {strides = array<i32>} : memref<153x2xf32, #tpu.memory_space<vmem>>, vector<9x2xf32>,
    %c7 = arith.constant 7 : index
    %c0_37 = arith.constant 0 : index
    %41 = vector.load %arg5[%c7, %c0_37] : memref<17x2xf32, #tpu.memory_space<vmem>>, vector<1x2xf32>
    %42 = vector.broadcast %41 : vector<1x2xf32> to vector<9x2xf32>
    %43 = arith.mulf %42, %12 : vector<9x2xf32>
    %c63 = arith.constant 63 : index
    %c0_38 = arith.constant 0 : index
    %44 = vector.load %arg8[%c63, %c0_38] : memref<153x2xf32, #tpu.memory_space<vmem>>, vector<9x2xf32>
    tpu.vector_store %arg8[%c63, %c0_38], %43 {strides = array<i32>} : memref<153x2xf32, #tpu.memory_space<vmem>>, vector<9x2xf32>,
    %c8 = arith.constant 8 : index
    %c0_39 = arith.constant 0 : index
    %45 = vector.load %arg5[%c8, %c0_39] : memref<17x2xf32, #tpu.memory_space<vmem>>, vector<1x2xf32>
    %46 = vector.broadcast %45 : vector<1x2xf32> to vector<9x2xf32>
    %47 = arith.mulf %46, %12 : vector<9x2xf32>
    %c72 = arith.constant 72 : index
    %c0_40 = arith.constant 0 : index
    %48 = vector.load %arg8[%c72, %c0_40] : memref<153x2xf32, #tpu.memory_space<vmem>>, vector<9x2xf32>
    tpu.vector_store %arg8[%c72, %c0_40], %47 {strides = array<i32>} : memref<153x2xf32, #tpu.memory_space<vmem>>, vector<9x2xf32>,
    %c9_41 = arith.constant 9 : index
    %c0_42 = arith.constant 0 : index
    %49 = vector.load %arg5[%c9_41, %c0_42] : memref<17x2xf32, #tpu.memory_space<vmem>>, vector<1x2xf32>
    %50 = vector.broadcast %49 : vector<1x2xf32> to vector<9x2xf32>
    %51 = arith.mulf %50, %12 : vector<9x2xf32>
    %c81 = arith.constant 81 : index
    %c0_43 = arith.constant 0 : index
    %52 = vector.load %arg8[%c81, %c0_43] : memref<153x2xf32, #tpu.memory_space<vmem>>, vector<9x2xf32>
    tpu.vector_store %arg8[%c81, %c0_43], %51 {strides = array<i32>} : memref<153x2xf32, #tpu.memory_space<vmem>>, vector<9x2xf32>,
    %c10 = arith.constant 10 : index
    %c0_44 = arith.constant 0 : index
    %53 = vector.load %arg5[%c10, %c0_44] : memref<17x2xf32, #tpu.memory_space<vmem>>, vector<1x2xf32>
    %54 = vector.broadcast %53 : vector<1x2xf32> to vector<9x2xf32>
    %55 = arith.mulf %54, %12 : vector<9x2xf32>
    %c90 = arith.constant 90 : index
    %c0_45 = arith.constant 0 : index
    %56 = vector.load %arg8[%c90, %c0_45] : memref<153x2xf32, #tpu.memory_space<vmem>>, vector<9x2xf32>
    tpu.vector_store %arg8[%c90, %c0_45], %55 {strides = array<i32>} : memref<153x2xf32, #tpu.memory_space<vmem>>, vector<9x2xf32>,
    %c11 = arith.constant 11 : index
    %c0_46 = arith.constant 0 : index
    %57 = vector.load %arg5[%c11, %c0_46] : memref<17x2xf32, #tpu.memory_space<vmem>>, vector<1x2xf32>
    %58 = vector.broadcast %57 : vector<1x2xf32> to vector<9x2xf32>
    %59 = arith.mulf %58, %12 : vector<9x2xf32>
    %c99 = arith.constant 99 : index
    %c0_47 = arith.constant 0 : index
    %60 = vector.load %arg8[%c99, %c0_47] : memref<153x2xf32, #tpu.memory_space<vmem>>, vector<9x2xf32>
    tpu.vector_store %arg8[%c99, %c0_47], %59 {strides = array<i32>} : memref<153x2xf32, #tpu.memory_space<vmem>>, vector<9x2xf32>,
    %c12 = arith.constant 12 : index
    %c0_48 = arith.constant 0 : index
    %61 = vector.load %arg5[%c12, %c0_48] : memref<17x2xf32, #tpu.memory_space<vmem>>, vector<1x2xf32>
    %62 = vector.broadcast %61 : vector<1x2xf32> to vector<9x2xf32>
    %63 = arith.mulf %62, %12 : vector<9x2xf32>
    %c108 = arith.constant 108 : index
    %c0_49 = arith.constant 0 : index
    %64 = vector.load %arg8[%c108, %c0_49] : memref<153x2xf32, #tpu.memory_space<vmem>>, vector<9x2xf32>
    tpu.vector_store %arg8[%c108, %c0_49], %63 {strides = array<i32>} : memref<153x2xf32, #tpu.memory_space<vmem>>, vector<9x2xf32>,
    %c13 = arith.constant 13 : index
    %c0_50 = arith.constant 0 : index
    %65 = vector.load %arg5[%c13, %c0_50] : memref<17x2xf32, #tpu.memory_space<vmem>>, vector<1x2xf32>
    %66 = vector.broadcast %65 : vector<1x2xf32> to vector<9x2xf32>
    %67 = arith.mulf %66, %12 : vector<9x2xf32>
    %c117 = arith.constant 117 : index
    %c0_51 = arith.constant 0 : index
    %68 = vector.load %arg8[%c117, %c0_51] : memref<153x2xf32, #tpu.memory_space<vmem>>, vector<9x2xf32>
    tpu.vector_store %arg8[%c117, %c0_51], %67 {strides = array<i32>} : memref<153x2xf32, #tpu.memory_space<vmem>>, vector<9x2xf32>,
    %c14 = arith.constant 14 : index
    %c0_52 = arith.constant 0 : index
    %69 = vector.load %arg5[%c14, %c0_52] : memref<17x2xf32, #tpu.memory_space<vmem>>, vector<1x2xf32>
    %70 = vector.broadcast %69 : vector<1x2xf32> to vector<9x2xf32>
    %71 = arith.mulf %70, %12 : vector<9x2xf32>
    %c126 = arith.constant 126 : index
    %c0_53 = arith.constant 0 : index
    %72 = vector.load %arg8[%c126, %c0_53] : memref<153x2xf32, #tpu.memory_space<vmem>>, vector<9x2xf32>
    tpu.vector_store %arg8[%c126, %c0_53], %71 {strides = array<i32>} : memref<153x2xf32, #tpu.memory_space<vmem>>, vector<9x2xf32>,
    %c15 = arith.constant 15 : index
    %c0_54 = arith.constant 0 : index
    %73 = vector.load %arg5[%c15, %c0_54] : memref<17x2xf32, #tpu.memory_space<vmem>>, vector<1x2xf32>
    %74 = vector.broadcast %73 : vector<1x2xf32> to vector<9x2xf32>
    %75 = arith.mulf %74, %12 : vector<9x2xf32>
    %c135 = arith.constant 135 : index
    %c0_55 = arith.constant 0 : index
    %76 = vector.load %arg8[%c135, %c0_55] : memref<153x2xf32, #tpu.memory_space<vmem>>, vector<9x2xf32>
    tpu.vector_store %arg8[%c135, %c0_55], %75 {strides = array<i32>} : memref<153x2xf32, #tpu.memory_space<vmem>>, vector<9x2xf32>,
    %c16 = arith.constant 16 : index
    %c0_56 = arith.constant 0 : index
    %77 = vector.load %arg5[%c16, %c0_56] : memref<17x2xf32, #tpu.memory_space<vmem>>, vector<1x2xf32>
    %78 = vector.broadcast %77 : vector<1x2xf32> to vector<9x2xf32>
    %79 = arith.mulf %78, %12 : vector<9x2xf32>
    %c144 = arith.constant 144 : index
    %c0_57 = arith.constant 0 : index
    %80 = vector.load %arg8[%c144, %c0_57] : memref<153x2xf32, #tpu.memory_space<vmem>>, vector<9x2xf32>
    tpu.vector_store %arg8[%c144, %c0_57], %79 {strides = array<i32>} : memref<153x2xf32, #tpu.memory_space<vmem>>, vector<9x2xf32>,
    %c0_58 = arith.constant 0 : index
    %c0_59 = arith.constant 0 : index
    %81 = vector.load %arg7[%c0_58, %c0_59] : memref<5x2xf32, #tpu.memory_space<vmem>>, vector<5x2xf32>
    %c0_i32 = arith.constant 0 : i32
    %c19_i32 = arith.constant 19 : i32
    %82 = arith.addi %c0_i32, %c19_i32 : i32
    %c1_i32 = arith.constant 1 : i32
    scf.for %arg9 = %c0_i32 to %82 step %c1_i32  : i32 {
      %c8_i32 = arith.constant 8 : i32
      %87 = arith.muli %arg9, %c8_i32 : i32
      %88 = tpu.assume_multiple %87, 8 : i32
      %c0_i32_63 = arith.constant 0 : i32
      %89 = arith.addi %88, %c0_i32_63 : i32
      %90 = arith.index_cast %89 : i32 to index
      %c0_64 = arith.constant 0 : index
      %91 = vector.load %arg8[%90, %c0_64] : memref<153x2xf32, #tpu.memory_space<vmem>>, vector<1x2xf32>
      %92 = vector.broadcast %91 : vector<1x2xf32> to vector<5x2xf32>
      %93 = arith.mulf %92, %81 : vector<5x2xf32>
      %c5_i32 = arith.constant 5 : i32
      %94 = arith.muli %89, %c5_i32 : i32
      %95 = arith.index_cast %94 : i32 to index
      %c0_65 = arith.constant 0 : index
      %96 = vector.load %arg4[%95, %c0_65] : memref<765x2xf32, #tpu.memory_space<vmem>>, vector<5x2xf32>
      tpu.vector_store %arg4[%95, %c0_65], %93 {strides = array<i32>} : memref<765x2xf32, #tpu.memory_space<vmem>>, vector<5x2xf32>,
      %c1_i32_66 = arith.constant 1 : i32
      %97 = arith.addi %88, %c1_i32_66 : i32
      %98 = arith.index_cast %97 : i32 to index
      %c0_67 = arith.constant 0 : index
      %99 = vector.load %arg8[%98, %c0_67] : memref<153x2xf32, #tpu.memory_space<vmem>>, vector<1x2xf32>
      %100 = vector.broadcast %99 : vector<1x2xf32> to vector<5x2xf32>
      %101 = arith.mulf %100, %81 : vector<5x2xf32>
      %c5_i32_68 = arith.constant 5 : i32
      %102 = arith.muli %97, %c5_i32_68 : i32
      %103 = arith.index_cast %102 : i32 to index
      %c0_69 = arith.constant 0 : index
      %104 = vector.load %arg4[%103, %c0_69] : memref<765x2xf32, #tpu.memory_space<vmem>>, vector<5x2xf32>
      tpu.vector_store %arg4[%103, %c0_69], %101 {strides = array<i32>} : memref<765x2xf32, #tpu.memory_space<vmem>>, vector<5x2xf32>,
      %c2_i32 = arith.constant 2 : i32
      %105 = arith.addi %88, %c2_i32 : i32
      %106 = arith.index_cast %105 : i32 to index
      %c0_70 = arith.constant 0 : index
      %107 = vector.load %arg8[%106, %c0_70] : memref<153x2xf32, #tpu.memory_space<vmem>>, vector<1x2xf32>
      %108 = vector.broadcast %107 : vector<1x2xf32> to vector<5x2xf32>
      %109 = arith.mulf %108, %81 : vector<5x2xf32>
      %c5_i32_71 = arith.constant 5 : i32
      %110 = arith.muli %105, %c5_i32_71 : i32
      %111 = arith.index_cast %110 : i32 to index
      %c0_72 = arith.constant 0 : index
      %112 = vector.load %arg4[%111, %c0_72] : memref<765x2xf32, #tpu.memory_space<vmem>>, vector<5x2xf32>
      tpu.vector_store %arg4[%111, %c0_72], %109 {strides = array<i32>} : memref<765x2xf32, #tpu.memory_space<vmem>>, vector<5x2xf32>,
      %c3_i32 = arith.constant 3 : i32
      %113 = arith.addi %88, %c3_i32 : i32
      %114 = arith.index_cast %113 : i32 to index
      %c0_73 = arith.constant 0 : index
      %115 = vector.load %arg8[%114, %c0_73] : memref<153x2xf32, #tpu.memory_space<vmem>>, vector<1x2xf32>
      %116 = vector.broadcast %115 : vector<1x2xf32> to vector<5x2xf32>
      %117 = arith.mulf %116, %81 : vector<5x2xf32>
      %c5_i32_74 = arith.constant 5 : i32
      %118 = arith.muli %113, %c5_i32_74 : i32
      %119 = arith.index_cast %118 : i32 to index
      %c0_75 = arith.constant 0 : index
      %120 = vector.load %arg4[%119, %c0_75] : memref<765x2xf32, #tpu.memory_space<vmem>>, vector<5x2xf32>
      tpu.vector_store %arg4[%119, %c0_75], %117 {strides = array<i32>} : memref<765x2xf32, #tpu.memory_space<vmem>>, vector<5x2xf32>,
      %c4_i32 = arith.constant 4 : i32
      %121 = arith.addi %88, %c4_i32 : i32
      %122 = arith.index_cast %121 : i32 to index
      %c0_76 = arith.constant 0 : index
      %123 = vector.load %arg8[%122, %c0_76] : memref<153x2xf32, #tpu.memory_space<vmem>>, vector<1x2xf32>
      %124 = vector.broadcast %123 : vector<1x2xf32> to vector<5x2xf32>
      %125 = arith.mulf %124, %81 : vector<5x2xf32>
      %c5_i32_77 = arith.constant 5 : i32
      %126 = arith.muli %121, %c5_i32_77 : i32
      %127 = arith.index_cast %126 : i32 to index
      %c0_78 = arith.constant 0 : index
      %128 = vector.load %arg4[%127, %c0_78] : memref<765x2xf32, #tpu.memory_space<vmem>>, vector<5x2xf32>
      tpu.vector_store %arg4[%127, %c0_78], %125 {strides = array<i32>} : memref<765x2xf32, #tpu.memory_space<vmem>>, vector<5x2xf32>,
      %c5_i32_79 = arith.constant 5 : i32
      %129 = arith.addi %88, %c5_i32_79 : i32
      %130 = arith.index_cast %129 : i32 to index
      %c0_80 = arith.constant 0 : index
      %131 = vector.load %arg8[%130, %c0_80] : memref<153x2xf32, #tpu.memory_space<vmem>>, vector<1x2xf32>
      %132 = vector.broadcast %131 : vector<1x2xf32> to vector<5x2xf32>
      %133 = arith.mulf %132, %81 : vector<5x2xf32>
      %c5_i32_81 = arith.constant 5 : i32
      %134 = arith.muli %129, %c5_i32_81 : i32
      %135 = arith.index_cast %134 : i32 to index
      %c0_82 = arith.constant 0 : index
      %136 = vector.load %arg4[%135, %c0_82] : memref<765x2xf32, #tpu.memory_space<vmem>>, vector<5x2xf32>
      tpu.vector_store %arg4[%135, %c0_82], %133 {strides = array<i32>} : memref<765x2xf32, #tpu.memory_space<vmem>>, vector<5x2xf32>,
      %c6_i32 = arith.constant 6 : i32
      %137 = arith.addi %88, %c6_i32 : i32
      %138 = arith.index_cast %137 : i32 to index
      %c0_83 = arith.constant 0 : index
      %139 = vector.load %arg8[%138, %c0_83] : memref<153x2xf32, #tpu.memory_space<vmem>>, vector<1x2xf32>
      %140 = vector.broadcast %139 : vector<1x2xf32> to vector<5x2xf32>
      %141 = arith.mulf %140, %81 : vector<5x2xf32>
      %c5_i32_84 = arith.constant 5 : i32
      %142 = arith.muli %137, %c5_i32_84 : i32
      %143 = arith.index_cast %142 : i32 to index
      %c0_85 = arith.constant 0 : index
      %144 = vector.load %arg4[%143, %c0_85] : memref<765x2xf32, #tpu.memory_space<vmem>>, vector<5x2xf32>
      tpu.vector_store %arg4[%143, %c0_85], %141 {strides = array<i32>} : memref<765x2xf32, #tpu.memory_space<vmem>>, vector<5x2xf32>,
      %c7_i32 = arith.constant 7 : i32
      %145 = arith.addi %88, %c7_i32 : i32
      %146 = arith.index_cast %145 : i32 to index
      %c0_86 = arith.constant 0 : index
      %147 = vector.load %arg8[%146, %c0_86] : memref<153x2xf32, #tpu.memory_space<vmem>>, vector<1x2xf32>
      %148 = vector.broadcast %147 : vector<1x2xf32> to vector<5x2xf32>
      %149 = arith.mulf %148, %81 : vector<5x2xf32>
      %c5_i32_87 = arith.constant 5 : i32
      %150 = arith.muli %145, %c5_i32_87 : i32
      %151 = arith.index_cast %150 : i32 to index
      %c0_88 = arith.constant 0 : index
      %152 = vector.load %arg4[%151, %c0_88] : memref<765x2xf32, #tpu.memory_space<vmem>>, vector<5x2xf32>
      tpu.vector_store %arg4[%151, %c0_88], %149 {strides = array<i32>} : memref<765x2xf32, #tpu.memory_space<vmem>>, vector<5x2xf32>,
    }
    %c19_i32_60 = arith.constant 19 : i32
    %c152 = arith.constant 152 : index
    %c0_61 = arith.constant 0 : index
    %83 = vector.load %arg8[%c152, %c0_61] : memref<153x2xf32, #tpu.memory_space<vmem>>, vector<1x2xf32>
    %84 = vector.broadcast %83 : vector<1x2xf32> to vector<5x2xf32>
    %85 = arith.mulf %84, %81 : vector<5x2xf32>
    %c760 = arith.constant 760 : index
    %c0_62 = arith.constant 0 : index
    %86 = vector.load %arg4[%c760, %c0_62] : memref<765x2xf32, #tpu.memory_space<vmem>>, vector<5x2xf32>
    tpu.vector_store %arg4[%c760, %c0_62], %85 {strides = array<i32>} : memref<765x2xf32, #tpu.memory_space<vmem>>, vector<5x2xf32>,
    return
  }
  func.func @transform_0(%arg0: i32) -> (i32, i32) {
    %c0_i32 = arith.constant 0 : i32
    %c0_i32_0 = arith.constant 0 : i32
    return %c0_i32, %arg0 : i32, i32
  }
  func.func @transform_1(%arg0: i32) -> (i32, i32) {
    %c0_i32 = arith.constant 0 : i32
    %c0_i32_0 = arith.constant 0 : i32
    return %c0_i32, %arg0 : i32, i32
  }
  func.func @transform_2(%arg0: i32) -> (i32, i32) {
    %c0_i32 = arith.constant 0 : i32
    %c0_i32_0 = arith.constant 0 : i32
    return %c0_i32, %arg0 : i32, i32
  }
  func.func @transform_3(%arg0: i32) -> (i32, i32) {
    %c0_i32 = arith.constant 0 : i32
    %c0_i32_0 = arith.constant 0 : i32
    return %c0_i32, %arg0 : i32, i32
  }
}

</mosaic_0001>

<llo_original>
// kernel: tpu_custom_call.1
$region0: #{tpu_custom_call.1}
  #allocation0 [shape = 'u32[]', space=smem, size = 0x4, offset = 0x4, fixed_abs, tag = 'smem constant byte address 0x4 - core index']
  #allocation1 [shape = 'u32[144,128]{1,0:T(1,128)}', space=vmem, size = 0x12000, scoped, tag = 'internal scratch']
  #allocation2 [shape = 'f32[17,2]{1,0:T(8,128)}', space=vmem, size = 0x3000, scoped, tag = 'scratch operand']
  #allocation3 [shape = 'f32[9,2]{1,0:T(8,128)}', space=vmem, size = 0x2000, scoped, tag = 'scratch operand']
  #allocation4 [shape = 'f32[5,2]{1,0:T(8,128)}', space=vmem, size = 0x1000, scoped, tag = 'scratch operand']
  #allocation5 [shape = 'f32[153,2]{1,0:T(8,128)}', space=vmem, size = 0x14000, scoped, tag = 'scratch operand']
  %s0 = inlined_call_operand.vmem [shape: f32[16,2], index: 0, kind: input, shape index: {}]
  %s1 = inlined_call_operand.vmem [shape: f32[8,2], index: 1, kind: input, shape index: {}]
  %s2 = inlined_call_operand.vmem [shape: f32[4,2], index: 2, kind: input, shape index: {}]
  %s3 = inlined_call_operand.vmem [shape: f32[765,2], index: 3, kind: output, shape index: {}]
  %s4 = sld [smem:[#allocation0]]
  $region29: #{tpu_custom_call.1} parent=0
    _
  %s6 = ssub.s32 1, %s4
  %s7 = scalar_select 0, %s6, %s4
  // Predicated region
  $region2: #{tpu_custom_call.1} parent=0 // pred_check
    _
  $region3: #{tpu_custom_call.1} parent=0 // pred_check_branch
    %9 = sbr.rel (0) target = $region5
  $region4: #{tpu_custom_call.1} parent=0 // pred_region
    _
  $region5: #{tpu_custom_call.1} parent=0 // pred_fallthru
    _
  // Predicated region
  $region6: #{tpu_custom_call.1} parent=0 // pred_check
    _
  $region7: #{tpu_custom_call.1} parent=0 // pred_check_branch
    %11 = sbr.rel (0) target = $region9
  $region8: #{tpu_custom_call.1} parent=0 // pred_region
    _
  $region9: #{tpu_custom_call.1} parent=0 // pred_fallthru
    _
  // Predicated region
  $region10: #{tpu_custom_call.1} parent=0 // pred_check
    _
  $region11: #{tpu_custom_call.1} parent=0 // pred_check_branch
    %13 = sbr.rel (0) target = $region13
  $region12: #{tpu_custom_call.1} parent=0 // pred_region
    _
  $region13: #{tpu_custom_call.1} parent=0 // pred_fallthru
    _
  %vm14 = vcmask 8192
  %15 = vst.msk [vmem:[#allocation2] sm:$0x1] %vm14, 1.0
  %v16 = vld [vmem:[%s0] sm:$0xff]
  %v17 = vld [vmem:[%s0 + $0x8] sm:$0xff]
  %vm18 = vcmask 15360
  %19 = vst.msk [vmem:[#allocation2 + $0x1] sm:$0xff] %vm18, %v16
  %20 = vst.msk [vmem:[#allocation2 + $0x9] sm:$0xff] %vm18, %v17
  %21 = vst.msk [vmem:[#allocation3] sm:$0x1] %vm14, 1.0
  %v22 = vld [vmem:[%s1] sm:$0xff]
  %23 = vst.msk [vmem:[#allocation3 + $0x1] sm:$0xff] %vm18, %v22
  %24 = vst.msk [vmem:[#allocation4] sm:$0x1] %vm14, 1.0
  %v25 = vld [vmem:[%s2] sm:$0xf]
  %vm26 = vcmask 11264
  %27 = vst.msk [vmem:[#allocation4 + $0x1] sm:$0xf] %vm26, %v25
  %v28 = vld [vmem:[#allocation3] sm:$0xff]
  %v29 = vld [vmem:[#allocation3 + $0x8] sm:$0x1]
  %v30 = vld [vmem:[#allocation2] sm:$0x1]
  %v31 = vlaneseq
  %v32 = vshrl.u32 %v31, 7
  %v33 = vsub.s32 0, %v32
  %v34 = vrot.slane %v30, %v33
  %v35 = vmul.f32 %v34, %v28
  %v36 = vmul.f32 %v34, %v29
  %37 = vst.msk [vmem:[#allocation5] sm:$0xff] %vm18, %v35
  %38 = vst.msk [vmem:[#allocation5 + $0x8] sm:$0x1] %vm14, %v36
  %v39 = vld [vmem:[#allocation2 + $0x1] sm:$0x1]
  %v40 = vlaneseq
  %v41 = vshrl.u32 %v40, 7
  %v42 = vsub.s32 0, %v41
  %v43 = vrot.slane %v39, %v42
  %v44 = vmul.f32 %v43, %v28
  %v45 = vmul.f32 %v43, %v29
  %46 = vst.msk [vmem:[#allocation5 + $0x9] sm:$0xff] %vm18, %v44
  %47 = vst.msk [vmem:[#allocation5 + $0x11] sm:$0x1] %vm14, %v45
  %v48 = vld [vmem:[#allocation2 + $0x2] sm:$0x1]
  %v49 = vlaneseq
  %v50 = vshrl.u32 %v49, 7
  %v51 = vsub.s32 0, %v50
  %v52 = vrot.slane %v48, %v51
  %v53 = vmul.f32 %v52, %v28
  %v54 = vmul.f32 %v52, %v29
  %55 = vst.msk [vmem:[#allocation5 + $0x12] sm:$0xff] %vm18, %v53
  %56 = vst.msk [vmem:[#allocation5 + $0x1a] sm:$0x1] %vm14, %v54
  %v57 = vld [vmem:[#allocation2 + $0x3] sm:$0x1]
  %v58 = vlaneseq
  %v59 = vshrl.u32 %v58, 7
  %v60 = vsub.s32 0, %v59
  %v61 = vrot.slane %v57, %v60
  %v62 = vmul.f32 %v61, %v28
  %v63 = vmul.f32 %v61, %v29
  %64 = vst.msk [vmem:[#allocation5 + $0x1b] sm:$0xff] %vm18, %v62
  %65 = vst.msk [vmem:[#allocation5 + $0x23] sm:$0x1] %vm14, %v63
  %v66 = vld [vmem:[#allocation2 + $0x4] sm:$0x1]
  %v67 = vlaneseq
  %v68 = vshrl.u32 %v67, 7
  %v69 = vsub.s32 0, %v68
  %v70 = vrot.slane %v66, %v69
  %v71 = vmul.f32 %v70, %v28
  %v72 = vmul.f32 %v70, %v29
  %73 = vst.msk [vmem:[#allocation5 + $0x24] sm:$0xff] %vm18, %v71
  %74 = vst.msk [vmem:[#allocation5 + $0x2c] sm:$0x1] %vm14, %v72
  %v75 = vld [vmem:[#allocation2 + $0x5] sm:$0x1]
  %v76 = vlaneseq
  %v77 = vshrl.u32 %v76, 7
  %v78 = vsub.s32 0, %v77
  %v79 = vrot.slane %v75, %v78
  %v80 = vmul.f32 %v79, %v28
  %v81 = vmul.f32 %v79, %v29
  %82 = vst.msk [vmem:[#allocation5 + $0x2d] sm:$0xff] %vm18, %v80
  %83 = vst.msk [vmem:[#allocation5 + $0x35] sm:$0x1] %vm14, %v81
  %v84 = vld [vmem:[#allocation2 + $0x6] sm:$0x1]
  %v85 = vlaneseq
  %v86 = vshrl.u32 %v85, 7
  %v87 = vsub.s32 0, %v86
  %v88 = vrot.slane %v84, %v87
  %v89 = vmul.f32 %v88, %v28
  %v90 = vmul.f32 %v88, %v29
  %91 = vst.msk [vmem:[#allocation5 + $0x36] sm:$0xff] %vm18, %v89
  %92 = vst.msk [vmem:[#allocation5 + $0x3e] sm:$0x1] %vm14, %v90
  %v93 = vld [vmem:[#allocation2 + $0x7] sm:$0x1]
  %v94 = vlaneseq
  %v95 = vshrl.u32 %v94, 7
  %v96 = vsub.s32 0, %v95
  %v97 = vrot.slane %v93, %v96
  %v98 = vmul.f32 %v97, %v28
  %v99 = vmul.f32 %v97, %v29
  %100 = vst.msk [vmem:[#allocation5 + $0x3f] sm:$0xff] %vm18, %v98
  %101 = vst.msk [vmem:[#allocation5 + $0x47] sm:$0x1] %vm14, %v99
  %v102 = vld [vmem:[#allocation2 + $0x8] sm:$0x1]
  %v103 = vlaneseq
  %v104 = vshrl.u32 %v103, 7
  %v105 = vsub.s32 0, %v104
  %v106 = vrot.slane %v102, %v105
  %v107 = vmul.f32 %v106, %v28
  %v108 = vmul.f32 %v106, %v29
  %109 = vst.msk [vmem:[#allocation5 + $0x48] sm:$0xff] %vm18, %v107
  %110 = vst.msk [vmem:[#allocation5 + $0x50] sm:$0x1] %vm14, %v108
  %v111 = vld [vmem:[#allocation2 + $0x9] sm:$0x1]
  %v112 = vlaneseq
  %v113 = vshrl.u32 %v112, 7
  %v114 = vsub.s32 0, %v113
  %v115 = vrot.slane %v111, %v114
  %v116 = vmul.f32 %v115, %v28
  %v117 = vmul.f32 %v115, %v29
  %118 = vst.msk [vmem:[#allocation5 + $0x51] sm:$0xff] %vm18, %v116
  %119 = vst.msk [vmem:[#allocation5 + $0x59] sm:$0x1] %vm14, %v117
  %v120 = vld [vmem:[#allocation2 + $0xa] sm:$0x1]
  %v121 = vlaneseq
  %v122 = vshrl.u32 %v121, 7
  %v123 = vsub.s32 0, %v122
  %v124 = vrot.slane %v120, %v123
  %v125 = vmul.f32 %v124, %v28
  %v126 = vmul.f32 %v124, %v29
  %127 = vst.msk [vmem:[#allocation5 + $0x5a] sm:$0xff] %vm18, %v125
  %128 = vst.msk [vmem:[#allocation5 + $0x62] sm:$0x1] %vm14, %v126
  %v129 = vld [vmem:[#allocation2 + $0xb] sm:$0x1]
  %v130 = vlaneseq
  %v131 = vshrl.u32 %v130, 7
  %v132 = vsub.s32 0, %v131
  %v133 = vrot.slane %v129, %v132
  %v134 = vmul.f32 %v133, %v28
  %v135 = vmul.f32 %v133, %v29
  %136 = vst.msk [vmem:[#allocation5 + $0x63] sm:$0xff] %vm18, %v134
  %137 = vst.msk [vmem:[#allocation5 + $0x6b] sm:$0x1] %vm14, %v135
  %v138 = vld [vmem:[#allocation2 + $0xc] sm:$0x1]
  %v139 = vlaneseq
  %v140 = vshrl.u32 %v139, 7
  %v141 = vsub.s32 0, %v140
  %v142 = vrot.slane %v138, %v141
  %v143 = vmul.f32 %v142, %v28
  %v144 = vmul.f32 %v142, %v29
  %145 = vst.msk [vmem:[#allocation5 + $0x6c] sm:$0xff] %vm18, %v143
  %146 = vst.msk [vmem:[#allocation5 + $0x74] sm:$0x1] %vm14, %v144
  %v147 = vld [vmem:[#allocation2 + $0xd] sm:$0x1]
  %v148 = vlaneseq
  %v149 = vshrl.u32 %v148, 7
  %v150 = vsub.s32 0, %v149
  %v151 = vrot.slane %v147, %v150
  %v152 = vmul.f32 %v151, %v28
  %v153 = vmul.f32 %v151, %v29
  %154 = vst.msk [vmem:[#allocation5 + $0x75] sm:$0xff] %vm18, %v152
  %155 = vst.msk [vmem:[#allocation5 + $0x7d] sm:$0x1] %vm14, %v153
  %v156 = vld [vmem:[#allocation2 + $0xe] sm:$0x1]
  %v157 = vlaneseq
  %v158 = vshrl.u32 %v157, 7
  %v159 = vsub.s32 0, %v158
  %v160 = vrot.slane %v156, %v159
  %v161 = vmul.f32 %v160, %v28
  %v162 = vmul.f32 %v160, %v29
  %163 = vst.msk [vmem:[#allocation5 + $0x7e] sm:$0xff] %vm18, %v161
  %164 = vst.msk [vmem:[#allocation5 + $0x86] sm:$0x1] %vm14, %v162
  %v165 = vld [vmem:[#allocation2 + $0xf] sm:$0x1]
  %v166 = vlaneseq
  %v167 = vshrl.u32 %v166, 7
  %v168 = vsub.s32 0, %v167
  %v169 = vrot.slane %v165, %v168
  %v170 = vmul.f32 %v169, %v28
  %v171 = vmul.f32 %v169, %v29
  %172 = vst.msk [vmem:[#allocation5 + $0x87] sm:$0xff] %vm18, %v170
  %173 = vst.msk [vmem:[#allocation5 + $0x8f] sm:$0x1] %vm14, %v171
  %v174 = vld [vmem:[#allocation2 + $0x10] sm:$0x1]
  %v175 = vlaneseq
  %v176 = vshrl.u32 %v175, 7
  %v177 = vsub.s32 0, %v176
  %v178 = vrot.slane %v174, %v177
  %v179 = vmul.f32 %v178, %v28
  %v180 = vmul.f32 %v178, %v29
  %181 = vst.msk [vmem:[#allocation5 + $0x90] sm:$0xff] %vm18, %v179
  %182 = vst.msk [vmem:[#allocation5 + $0x98] sm:$0x1] %vm14, %v180
  %v183 = vld [vmem:[#allocation4] sm:$0x1f]
  loop: start=0, step=1, limit=19
  $region14: #{tpu_custom_call.1} parent=0 // loop_pre_header
    _
  $region15: #{tpu_custom_call.1} parent=0 // loop_header
    %s185 = sphi 0, %s189
    %p186 = scmp.ge.s32.totalorder %s185, 19
  $region16: #{tpu_custom_call.1} parent=0 // loop_header_branch
    %188 = sbr.rel (%p186) target = $region20
  $region17: #{tpu_custom_call.1} parent=0 // loop_body
    %s190 = smul.u32 %s185, 8
    %s191 = scalar_lea.vmem [#allocation5], %s190
    %v192 = vld [vmem:[%s191] sm:$0x1]
    %v193 = vlaneseq
    %v194 = vshrl.u32 %v193, 7
    %v195 = vsub.s32 0, %v194
    %v196 = vrot.slane %v192, %v195
    %v197 = vmul.f32 %v196, %v183
    %s198 = smul.u32 %s190, 5
    %s199 = scalar_lea.vmem %s3, %s198
    %vm200 = vcmask 12288
    %201 = vst.msk [vmem:[%s199] sm:$0x1f] %vm200, %v197
    %s202 = sadd.s32 %s190, 1
    %s203 = scalar_lea.vmem [#allocation5], %s202
    %v204 = vld [vmem:[%s203] sm:$0x1]
    %v205 = vlaneseq
    %v206 = vshrl.u32 %v205, 7
    %v207 = vsub.s32 0, %v206
    %v208 = vrot.slane %v204, %v207
    %v209 = vmul.f32 %v208, %v183
    %s210 = smul.u32 %s202, 5
    %s211 = scalar_lea.vmem %s3, %s210
    %212 = vst.msk [vmem:[%s211] sm:$0x1f] %vm200, %v209
    %s213 = sadd.s32 %s190, 2
    %s214 = scalar_lea.vmem [#allocation5], %s213
    %v215 = vld [vmem:[%s214] sm:$0x1]
    %v216 = vlaneseq
    %v217 = vshrl.u32 %v216, 7
    %v218 = vsub.s32 0, %v217
    %v219 = vrot.slane %v215, %v218
    %v220 = vmul.f32 %v219, %v183
    %s221 = smul.u32 %s213, 5
    %s222 = scalar_lea.vmem %s3, %s221
    %223 = vst.msk [vmem:[%s222] sm:$0x1f] %vm200, %v220
    %s224 = sadd.s32 %s190, 3
    %s225 = scalar_lea.vmem [#allocation5], %s224
    %v226 = vld [vmem:[%s225] sm:$0x1]
    %v227 = vlaneseq
    %v228 = vshrl.u32 %v227, 7
    %v229 = vsub.s32 0, %v228
    %v230 = vrot.slane %v226, %v229
    %v231 = vmul.f32 %v230, %v183
    %s232 = smul.u32 %s224, 5
    %s233 = scalar_lea.vmem %s3, %s232
    %234 = vst.msk [vmem:[%s233] sm:$0x1f] %vm200, %v231
    %s235 = sadd.s32 %s190, 4
    %s236 = scalar_lea.vmem [#allocation5], %s235
    %v237 = vld [vmem:[%s236] sm:$0x1]
    %v238 = vlaneseq
    %v239 = vshrl.u32 %v238, 7
    %v240 = vsub.s32 0, %v239
    %v241 = vrot.slane %v237, %v240
    %v242 = vmul.f32 %v241, %v183
    %s243 = smul.u32 %s235, 5
    %s244 = scalar_lea.vmem %s3, %s243
    %245 = vst.msk [vmem:[%s244] sm:$0x1f] %vm200, %v242
    %s246 = sadd.s32 %s190, 5
    %s247 = scalar_lea.vmem [#allocation5], %s246
    %v248 = vld [vmem:[%s247] sm:$0x1]
    %v249 = vlaneseq
    %v250 = vshrl.u32 %v249, 7
    %v251 = vsub.s32 0, %v250
    %v252 = vrot.slane %v248, %v251
    %v253 = vmul.f32 %v252, %v183
    %s254 = smul.u32 %s246, 5
    %s255 = scalar_lea.vmem %s3, %s254
    %256 = vst.msk [vmem:[%s255] sm:$0x1f] %vm200, %v253
    %s257 = sadd.s32 %s190, 6
    %s258 = scalar_lea.vmem [#allocation5], %s257
    %v259 = vld [vmem:[%s258] sm:$0x1]
    %v260 = vlaneseq
    %v261 = vshrl.u32 %v260, 7
    %v262 = vsub.s32 0, %v261
    %v263 = vrot.slane %v259, %v262
    %v264 = vmul.f32 %v263, %v183
    %s265 = smul.u32 %s257, 5
    %s266 = scalar_lea.vmem %s3, %s265
    %267 = vst.msk [vmem:[%s266] sm:$0x1f] %vm200, %v264
    %s268 = sadd.s32 %s190, 7
    %s269 = scalar_lea.vmem [#allocation5], %s268
    %v270 = vld [vmem:[%s269] sm:$0x1]
    %v271 = vlaneseq
    %v272 = vshrl.u32 %v271, 7
    %v273 = vsub.s32 0, %v272
    %v274 = vrot.slane %v270, %v273
    %v275 = vmul.f32 %v274, %v183
    %s276 = smul.u32 %s268, 5
    %s277 = scalar_lea.vmem %s3, %s276
    %278 = vst.msk [vmem:[%s277] sm:$0x1f] %vm200, %v275
  $region18: #{tpu_custom_call.1} parent=0 // loop_footer
    %s189 = sadd.s32 1, %s185
  $region19: #{tpu_custom_call.1} parent=0 // loop_footer_branch
    %184 = sbr.rel target = $region15
  $region20: #{tpu_custom_call.1} parent=0 // loop_exit
    _
  %v279 = vld [vmem:[#allocation5 + $0x98] sm:$0x1]
  %v280 = vlaneseq
  %v281 = vshrl.u32 %v280, 7
  %v282 = vsub.s32 0, %v281
  %v283 = vrot.slane %v279, %v282
  %v284 = vmul.f32 %v283, %v183
  %vm285 = vcmask 12288
  %286 = vst.msk [vmem:[%s3 + $0x2f8] sm:$0x1f] %vm285, %v284
  // Predicated region
  $region21: #{tpu_custom_call.1} parent=0 // pred_check
    _
  $region22: #{tpu_custom_call.1} parent=0 // pred_check_branch
    %288 = sbr.rel (0) target = $region24
  $region23: #{tpu_custom_call.1} parent=0 // pred_region
    _
  $region24: #{tpu_custom_call.1} parent=0 // pred_fallthru
    _
  // Predicated region
  $region25: #{tpu_custom_call.1} parent=0 // pred_check
    _
  $region26: #{tpu_custom_call.1} parent=0 // pred_check_branch
    %290 = sbr.rel (0) target = $region28
  $region27: #{tpu_custom_call.1} parent=0 // pred_region
    _
  $region28: #{tpu_custom_call.1} parent=0 // pred_fallthru
    _

</llo_original>
